<compile_context>
chip_gen: v5e
topology: v5e:2x2
jax: 0.10.0
libtpu: 0.0.40
codegen_flags: <defaults>
</compile_context>

<pallas_src>
import functools

import jax
import jax.numpy as jnp
from jax.experimental import pallas as pl
from jax.experimental.pallas import tpu as pltpu


def char_embedding_kernel(emb_w_ref, emb_c_ref,
                          pw_w_ref, pw_c_ref,
                          gwt0_ref, gbt0_ref,
                          gwt1_ref, gbt1_ref,
                          out_ref, *, char_dim, hidden, fold_halves):
    # Char max-pool over char positions (PyTorch: emb_c.max(dim=-2)).
    m = jnp.max(emb_c_ref[...], axis=1)                                   # (tn, Dc) or (tn, 2*Dc)
    if fold_halves:
        # Lane-dense layout: lanes [0:Dc] hold even char positions, [Dc:2Dc] odd ones.
        # Fold with an XLU roll; afterwards BOTH halves hold the full per-feature max,
        # and pw_c was zero-padded on its bottom half so the projection dot is exact.
        m32 = m.astype(jnp.float32)
        m = jnp.maximum(m32, pltpu.roll(m32, char_dim, axis=1)).astype(m.dtype)

    # Projection (no bias): concat(emb_w, emb_c_pooled) @ Wp, split as two MXU dots.
    x = (jnp.dot(emb_w_ref[...], pw_w_ref[...], preferred_element_type=jnp.float32)
         + jnp.dot(m, pw_c_ref[...], preferred_element_type=jnp.float32))  # (tn, H) f32

    # Two highway layers, gate+transform fused into one (H, 2H) matmul each.
    for gwt_ref, gbt_ref in ((gwt0_ref, gbt0_ref), (gwt1_ref, gbt1_ref)):
        h = (jnp.dot(x.astype(gwt_ref.dtype), gwt_ref[...],
                     preferred_element_type=jnp.float32) + gbt_ref[...])   # (tn, 2H) f32
        g = jax.nn.sigmoid(h[:, :hidden])
        t = jnp.maximum(h[:, hidden:], 0.0)
        x = x + g * (t - x)                                               # == g*t + (1-g)*x

    out_ref[...] = x.astype(out_ref.dtype)


def _round_up(x, m):
    return -(-x // m) * m


def char_embedding_forward(w, c, params, *, tile_n=256, compute_dtype=jnp.bfloat16):
    """w: (B, S) int32 word ids; c: (B, S, L) int32 char ids. Returns (B, S, H) f32."""
    word_vecs = params["word_vectors"]        # (V, Dw) f32
    char_vecs = params["char_vectors"]        # (257, Dc) f32, row 0 = padding zeros

    B, S = w.shape
    L = c.shape[-1]
    Dw = word_vecs.shape[1]
    Dc = char_vecs.shape[1]
    H = params["proj_w_word"].shape[1]
    N = B * S

    # Embedding lookups (gather) as plain-JAX glue; operands cast to bf16 for the MXU.
    emb_w = jnp.take(word_vecs, w.reshape(N), axis=0).astype(compute_dtype)            # (N, Dw)
    c_ids = jnp.minimum(c, 256).reshape(N * L)                                          # torch.minimum(c, 256)
    emb_c = jnp.take(char_vecs, c_ids, axis=0).reshape(N, L, Dc).astype(compute_dtype)  # (N, L, Dc)
    # TODO(synk): F.dropout is treated as eval-mode identity (no stochastic masking).

    # Pad the row dim to a tile multiple instead of requiring divisibility.
    tile_n = _round_up(min(tile_n, _round_up(N, 8)), 8)
    n_pad = _round_up(N, tile_n)
    if n_pad != N:
        emb_w = jnp.pad(emb_w, ((0, n_pad - N), (0, 0)))
        emb_c = jnp.pad(emb_c, ((0, n_pad - N), (0, 0), (0, 0)))

    # Lane-dense char layout: (N, L, Dc) -> (N, L//2, 2*Dc) fills full 128-lane vregs.
    fold_halves = (L % 2 == 0) and (2 * Dc == 128)
    if fold_halves:
        emb_c = emb_c.reshape(n_pad, L // 2, 2 * Dc)
        c_block = (tile_n, L // 2, 2 * Dc)
    else:
        c_block = (tile_n, L, Dc)

    # Weights pre-transposed to (in, out); gate+transform fused per highway layer.
    pw_w = params["proj_w_word"].astype(compute_dtype)                                  # (Dw, H)
    pw_c = params["proj_w_char"]
    if fold_halves:
        pw_c = jnp.concatenate([pw_c, jnp.zeros_like(pw_c)], axis=0)                    # (2*Dc, H)
    pw_c = pw_c.astype(compute_dtype)
    gwt0 = jnp.concatenate([params["gate_w0"], params["trans_w0"]], axis=1).astype(compute_dtype)  # (H, 2H)
    gwt1 = jnp.concatenate([params["gate_w1"], params["trans_w1"]], axis=1).astype(compute_dtype)
    gbt0 = jnp.concatenate([params["gate_b0"], params["trans_b0"]], axis=1)             # (1, 2H) f32
    gbt1 = jnp.concatenate([params["gate_b1"], params["trans_b1"]], axis=1)

    grid = (n_pad // tile_n,)
    full = lambda a: pl.BlockSpec(a.shape, lambda i: (0,) * a.ndim)   # weights resident across grid

    kernel = functools.partial(char_embedding_kernel,
                               char_dim=Dc, hidden=H, fold_halves=fold_halves)

    out = pl.pallas_call(
        kernel,
        out_shape=jax.ShapeDtypeStruct((n_pad, H), jnp.float32),
        grid_spec=pltpu.PrefetchScalarGridSpec(
            num_scalar_prefetch=0,
            grid=grid,
            in_specs=[
                pl.BlockSpec((tile_n, Dw), lambda i: (i, 0)),
                pl.BlockSpec(c_block, lambda i: (i, 0, 0)),
                full(pw_w), full(pw_c),
                full(gwt0), full(gbt0),
                full(gwt1), full(gbt1),
            ],
            out_specs=pl.BlockSpec((tile_n, H), lambda i: (i, 0)),
        ),
        compiler_params=pltpu.CompilerParams(
            dimension_semantics=("parallel",),            # disjoint output tiles -> megacore-shardable
            vmem_limit_bytes=32 * 1024 * 1024,            # headroom for large tile_n; safe on v5e/v6e/v7x
        ),
    )(emb_w, emb_c, pw_w, pw_c, gwt0, gbt0, gwt1, gbt1)

    return out[:N].reshape(B, S, H)


def reference_forward(w, c, params):
    """Pure-JAX reference (same math, HIGHEST precision) for a correctness check."""
    hp = jax.lax.Precision.HIGHEST
    word_vecs, char_vecs = params["word_vectors"], params["char_vectors"]
    emb_w = jnp.take(word_vecs, w, axis=0)
    emb_c = jnp.take(char_vecs, jnp.minimum(c, 256), axis=0).max(axis=-2)
    proj_w = jnp.concatenate([params["proj_w_word"], params["proj_w_char"]], axis=0)
    x = jnp.dot(jnp.concatenate([emb_w, emb_c], axis=-1), proj_w, precision=hp)
    for k in ("0", "1"):
        g = jax.nn.sigmoid(jnp.dot(x, params["gate_w" + k], precision=hp) + params["gate_b" + k])
        t = jax.nn.relu(jnp.dot(x, params["trans_w" + k], precision=hp) + params["trans_b" + k])
        x = g * t + (1.0 - g) * x
    return x


def make_params(key, vocab=100, word_dim=64, char_dim=64, hidden=128):
    ks = jax.random.split(key, 12)
    word_vectors = jax.random.normal(ks[0], (vocab, word_dim), jnp.float32)
    std = jnp.std(word_vectors)
    char_vectors = jax.random.normal(ks[1], (257, char_dim), jnp.float32) * (std / 4.0)
    char_vectors = char_vectors.at[0].set(0.0)                     # padding_idx=0
    d_in = word_dim + char_dim
    proj_w = jax.random.normal(ks[2], (d_in, hidden), jnp.float32) / jnp.sqrt(d_in)
    sc = 1.0 / jnp.sqrt(hidden)
    params = dict(
        word_vectors=word_vectors,
        char_vectors=char_vectors,
        proj_w_word=proj_w[:word_dim],
        proj_w_char=proj_w[word_dim:],
        gate_w0=jax.random.normal(ks[3], (hidden, hidden), jnp.float32) * sc,
        gate_b0=jax.random.normal(ks[4], (1, hidden), jnp.float32) * sc,
        trans_w0=jax.random.normal(ks[5], (hidden, hidden), jnp.float32) * sc,
        trans_b0=jax.random.normal(ks[6], (1, hidden), jnp.float32) * sc,
        gate_w1=jax.random.normal(ks[7], (hidden, hidden), jnp.float32) * sc,
        gate_b1=jax.random.normal(ks[8], (1, hidden), jnp.float32) * sc,
        trans_w1=jax.random.normal(ks[9], (hidden, hidden), jnp.float32) * sc,
        trans_b1=jax.random.normal(ks[10], (1, hidden), jnp.float32) * sc,
    )
    return params


if __name__ == "__main__":
    key = jax.random.PRNGKey(0)
    pkey, wkey, ckey = jax.random.split(key, 3)

    batch, seq, char_len = 2, 8, 16
    vocab, word_dim, char_dim, hidden = 100, 64, 64, 128

    params = make_params(pkey, vocab=vocab, word_dim=word_dim,
                         char_dim=char_dim, hidden=hidden)

    w = jax.random.randint(wkey, (batch, seq), 0, vocab, dtype=jnp.int32)
    # include some char ids > 256 to exercise the clamp, and 0 for padding rows
    c = jax.random.randint(ckey, (batch, seq, char_len), 0, 300, dtype=jnp.int32)

    out = char_embedding_forward(w, c, params)
    out = jax.block_until_ready(out)

    ref = reference_forward(w, c, params)
    assert out.shape == (batch, seq, hidden)
    assert jnp.allclose(out, ref, rtol=2e-2, atol=2e-2), "mismatch vs pure-JAX reference"

    print("KERNEL_OK")
</pallas_src>

<mosaic_0001>
module attributes {stable_mosaic.version = 11 : i64} {
  func.func @char_embedding_kernel(%arg0: i32, %arg1: memref<16x64xbf16, #tpu.memory_space<vmem>>, %arg2: memref<16x8x128xbf16, #tpu.memory_space<vmem>>, %arg3: memref<64x128xbf16, #tpu.memory_space<vmem>>, %arg4: memref<128x128xbf16, #tpu.memory_space<vmem>>, %arg5: memref<128x256xbf16, #tpu.memory_space<vmem>>, %arg6: memref<1x256xf32, #tpu.memory_space<vmem>>, %arg7: memref<128x256xbf16, #tpu.memory_space<vmem>>, %arg8: memref<1x256xf32, #tpu.memory_space<vmem>>, %arg9: memref<16x128xf32, #tpu.memory_space<vmem>>) attributes {dimension_semantics = [#tpu.dimension_semantics<parallel>], iteration_bounds = array<i64: 1>, scalar_prefetch = 0 : i64, scratch_operands = 0 : i64, tpu.core_type = #tpu.core_type<tc>, window_params = [{transform_indices = @transform_0, window_bounds = array<i64: 16, 64>}, {transform_indices = @transform_1, window_bounds = array<i64: 16, 8, 128>}, {pipeline_mode = #tpu.pipeline_mode<synchronous>, transform_indices = @transform_2, window_bounds = array<i64: 64, 128>}, {pipeline_mode = #tpu.pipeline_mode<synchronous>, transform_indices = @transform_3, window_bounds = array<i64: 128, 128>}, {pipeline_mode = #tpu.pipeline_mode<synchronous>, transform_indices = @transform_4, window_bounds = array<i64: 128, 256>}, {pipeline_mode = #tpu.pipeline_mode<synchronous>, transform_indices = @transform_5, window_bounds = array<i64: 1, 256>}, {pipeline_mode = #tpu.pipeline_mode<synchronous>, transform_indices = @transform_6, window_bounds = array<i64: 128, 256>}, {pipeline_mode = #tpu.pipeline_mode<synchronous>, transform_indices = @transform_7, window_bounds = array<i64: 1, 256>}, {transform_indices = @transform_8, window_bounds = array<i64: 16, 128>}]} {
    %c0 = arith.constant 0 : index
    %c0_0 = arith.constant 0 : index
    %c0_1 = arith.constant 0 : index
    %0 = vector.load %arg2[%c0, %c0_0, %c0_1] : memref<16x8x128xbf16, #tpu.memory_space<vmem>>, vector<16x8x128xbf16>
    %cst = arith.constant dense<0xFF80> : vector<16x128xbf16>
    %1 = vector.multi_reduction <maximumf>, %0, %cst [1] : vector<16x8x128xbf16> to vector<16x128xbf16>
    %2 = arith.extf %1 : vector<16x128xbf16> to vector<16x128xf32>
    %c64_i32 = arith.constant 64 : i32
    %3 = tpu.dynamic_rotate %2 by %c64_i32 dim 1 : vector<16x128xf32>, i32 -> vector<16x128xf32>
    %4 = arith.maximumf %2, %3 : vector<16x128xf32>
    %5 = arith.truncf %4 : vector<16x128xf32> to vector<16x128xbf16>
    %c0_2 = arith.constant 0 : index
    %c0_3 = arith.constant 0 : index
    %6 = vector.load %arg1[%c0_2, %c0_3] : memref<16x64xbf16, #tpu.memory_space<vmem>>, vector<16x64xbf16>
    %c0_4 = arith.constant 0 : index
    %c0_5 = arith.constant 0 : index
    %7 = vector.load %arg3[%c0_4, %c0_5] : memref<64x128xbf16, #tpu.memory_space<vmem>>, vector<64x128xbf16>
    %cst_6 = arith.constant dense<0.000000e+00> : vector<16x128xf32>
    %8 = tpu.matmul %6, %7, %cst_6 {dimension_numbers = #tpu.dot_dimension_numbers<[1], [0], [0], [1], [0, 0, 1, 1], [], []>} : vector<16x64xbf16>, vector<64x128xbf16>, vector<16x128xf32> -> vector<16x128xf32>
    %c0_7 = arith.constant 0 : index
    %c0_8 = arith.constant 0 : index
    %9 = vector.load %arg4[%c0_7, %c0_8] : memref<128x128xbf16, #tpu.memory_space<vmem>>, vector<128x128xbf16>
    %cst_9 = arith.constant dense<0.000000e+00> : vector<16x128xf32>
    %10 = tpu.matmul %5, %9, %cst_9 {dimension_numbers = #tpu.dot_dimension_numbers<[1], [0], [0], [1], [0, 0, 1, 1], [], []>} : vector<16x128xbf16>, vector<128x128xbf16>, vector<16x128xf32> -> vector<16x128xf32>
    %11 = arith.addf %8, %10 : vector<16x128xf32>
    %12 = arith.truncf %11 : vector<16x128xf32> to vector<16x128xbf16>
    %c0_10 = arith.constant 0 : index
    %c0_11 = arith.constant 0 : index
    %13 = vector.load %arg5[%c0_10, %c0_11] : memref<128x256xbf16, #tpu.memory_space<vmem>>, vector<128x256xbf16>
    %cst_12 = arith.constant dense<0.000000e+00> : vector<16x256xf32>
    %14 = tpu.matmul %12, %13, %cst_12 {dimension_numbers = #tpu.dot_dimension_numbers<[1], [0], [0], [1], [0, 0, 1, 1], [], []>} : vector<16x128xbf16>, vector<128x256xbf16>, vector<16x256xf32> -> vector<16x256xf32>
    %c0_13 = arith.constant 0 : index
    %c0_14 = arith.constant 0 : index
    %15 = vector.load %arg6[%c0_13, %c0_14] : memref<1x256xf32, #tpu.memory_space<vmem>>, vector<1x256xf32>
    %16 = vector.broadcast %15 : vector<1x256xf32> to vector<16x256xf32>
    %17 = arith.addf %14, %16 : vector<16x256xf32>
    %18 = vector.extract_strided_slice %17 {offsets = [0, 0], sizes = [16, 128], strides = [1, 1]} : vector<16x256xf32> to vector<16x128xf32>
    %19 = arith.negf %18 : vector<16x128xf32>
    %20 = math.exp %19 : vector<16x128xf32>
    %cst_15 = arith.constant 1.000000e+00 : f32
    %21 = vector.broadcast %cst_15 : f32 to vector<16x128xf32>
    %22 = arith.addf %21, %20 : vector<16x128xf32>
    %23 = arith.divf %21, %22 : vector<16x128xf32>
    %24 = vector.extract_strided_slice %17 {offsets = [0, 128], sizes = [16, 128], strides = [1, 1]} : vector<16x256xf32> to vector<16x128xf32>
    %cst_16 = arith.constant 0.000000e+00 : f32
    %25 = vector.broadcast %cst_16 : f32 to vector<16x128xf32>
    %26 = arith.maximumf %24, %25 : vector<16x128xf32>
    %27 = arith.subf %26, %11 : vector<16x128xf32>
    %28 = arith.mulf %23, %27 : vector<16x128xf32>
    %29 = arith.addf %11, %28 : vector<16x128xf32>
    %30 = arith.truncf %29 : vector<16x128xf32> to vector<16x128xbf16>
    %c0_17 = arith.constant 0 : index
    %c0_18 = arith.constant 0 : index
    %31 = vector.load %arg7[%c0_17, %c0_18] : memref<128x256xbf16, #tpu.memory_space<vmem>>, vector<128x256xbf16>
    %cst_19 = arith.constant dense<0.000000e+00> : vector<16x256xf32>
    %32 = tpu.matmul %30, %31, %cst_19 {dimension_numbers = #tpu.dot_dimension_numbers<[1], [0], [0], [1], [0, 0, 1, 1], [], []>} : vector<16x128xbf16>, vector<128x256xbf16>, vector<16x256xf32> -> vector<16x256xf32>
    %c0_20 = arith.constant 0 : index
    %c0_21 = arith.constant 0 : index
    %33 = vector.load %arg8[%c0_20, %c0_21] : memref<1x256xf32, #tpu.memory_space<vmem>>, vector<1x256xf32>
    %34 = vector.broadcast %33 : vector<1x256xf32> to vector<16x256xf32>
    %35 = arith.addf %32, %34 : vector<16x256xf32>
    %36 = vector.extract_strided_slice %35 {offsets = [0, 0], sizes = [16, 128], strides = [1, 1]} : vector<16x256xf32> to vector<16x128xf32>
    %37 = arith.negf %36 : vector<16x128xf32>
    %38 = math.exp %37 : vector<16x128xf32>
    %cst_22 = arith.constant 1.000000e+00 : f32
    %39 = vector.broadcast %cst_22 : f32 to vector<16x128xf32>
    %40 = arith.addf %39, %38 : vector<16x128xf32>
    %41 = arith.divf %39, %40 : vector<16x128xf32>
    %42 = vector.extract_strided_slice %35 {offsets = [0, 128], sizes = [16, 128], strides = [1, 1]} : vector<16x256xf32> to vector<16x128xf32>
    %cst_23 = arith.constant 0.000000e+00 : f32
    %43 = vector.broadcast %cst_23 : f32 to vector<16x128xf32>
    %44 = arith.maximumf %42, %43 : vector<16x128xf32>
    %45 = arith.subf %44, %29 : vector<16x128xf32>
    %46 = arith.mulf %41, %45 : vector<16x128xf32>
    %47 = arith.addf %29, %46 : vector<16x128xf32>
    %c0_24 = arith.constant 0 : index
    %c0_25 = arith.constant 0 : index
    %48 = vector.load %arg9[%c0_24, %c0_25] : memref<16x128xf32, #tpu.memory_space<vmem>>, vector<16x128xf32>
    tpu.vector_store %arg9[%c0_24, %c0_25], %47 {strides = array<i32>} : memref<16x128xf32, #tpu.memory_space<vmem>>, vector<16x128xf32>,
    return
  }
  func.func @transform_0(%arg0: i32) -> (i32, i32) {
    %c0_i32 = arith.constant 0 : i32
    %c0_i32_0 = arith.constant 0 : i32
    return %arg0, %c0_i32 : i32, i32
  }
  func.func @transform_1(%arg0: i32) -> (i32, i32, i32) {
    %c0_i32 = arith.constant 0 : i32
    %c0_i32_0 = arith.constant 0 : i32
    %c0_i32_1 = arith.constant 0 : i32
    return %arg0, %c0_i32, %c0_i32_0 : i32, i32, i32
  }
  func.func @transform_2(%arg0: i32) -> (i32, i32) {
    %c0_i32 = arith.constant 0 : i32
    %c0_i32_0 = arith.constant 0 : i32
    %c0_i32_1 = arith.constant 0 : i32
    return %c0_i32, %c0_i32_0 : i32, i32
  }
  func.func @transform_3(%arg0: i32) -> (i32, i32) {
    %c0_i32 = arith.constant 0 : i32
    %c0_i32_0 = arith.constant 0 : i32
    %c0_i32_1 = arith.constant 0 : i32
    return %c0_i32, %c0_i32_0 : i32, i32
  }
  func.func @transform_4(%arg0: i32) -> (i32, i32) {
    %c0_i32 = arith.constant 0 : i32
    %c0_i32_0 = arith.constant 0 : i32
    %c0_i32_1 = arith.constant 0 : i32
    return %c0_i32, %c0_i32_0 : i32, i32
  }
  func.func @transform_5(%arg0: i32) -> (i32, i32) {
    %c0_i32 = arith.constant 0 : i32
    %c0_i32_0 = arith.constant 0 : i32
    %c0_i32_1 = arith.constant 0 : i32
    return %c0_i32, %c0_i32_0 : i32, i32
  }
  func.func @transform_6(%arg0: i32) -> (i32, i32) {
    %c0_i32 = arith.constant 0 : i32
    %c0_i32_0 = arith.constant 0 : i32
    %c0_i32_1 = arith.constant 0 : i32
    return %c0_i32, %c0_i32_0 : i32, i32
  }
  func.func @transform_7(%arg0: i32) -> (i32, i32) {
    %c0_i32 = arith.constant 0 : i32
    %c0_i32_0 = arith.constant 0 : i32
    %c0_i32_1 = arith.constant 0 : i32
    return %c0_i32, %c0_i32_0 : i32, i32
  }
  func.func @transform_8(%arg0: i32) -> (i32, i32) {
    %c0_i32 = arith.constant 0 : i32
    %c0_i32_0 = arith.constant 0 : i32
    return %arg0, %c0_i32 : i32, i32
  }
}

</mosaic_0001>

<llo_original>
// kernel: tpu_custom_call.1
$region0: #{tpu_custom_call.1}
  #allocation0 [shape = 'u32[]', space=smem, size = 0x4, offset = 0x4, fixed_abs, tag = 'smem constant byte address 0x4 - core index']
  #allocation1 [shape = 'u32[72,128]{1,0:T(1,128)}', space=vmem, size = 0x9000, scoped, tag = 'internal scratch']
  %s0 = inlined_call_operand.hbm [shape: bf16[16,64], index: 0, kind: input, shape index: {}]
  %s1 = inlined_call_operand.hbm [shape: bf16[16,8,128], index: 1, kind: input, shape index: {}]
  %s2 = inlined_call_operand.hbm [shape: bf16[64,128], index: 2, kind: input, shape index: {}]
  %s3 = inlined_call_operand.hbm [shape: bf16[128,128], index: 3, kind: input, shape index: {}]
  %s4 = inlined_call_operand.hbm [shape: bf16[128,256], index: 4, kind: input, shape index: {}]
  %s5 = inlined_call_operand.vmem [shape: f32[1,256], index: 5, kind: input, shape index: {}]
  %s6 = inlined_call_operand.hbm [shape: bf16[128,256], index: 6, kind: input, shape index: {}]
  %s7 = inlined_call_operand.vmem [shape: f32[1,256], index: 7, kind: input, shape index: {}]
  %s8 = inlined_call_operand.hbm [shape: f32[16,128], index: 8, kind: output, shape index: {}]
  %s9 = sld [smem:[#allocation0]]
  $region66: #{tpu_custom_call.1} parent=0
    _
  %s11 = ssub.s32 1, %s9
  %s12 = scalar_select 0, %s11, %s9
  $region1: #{tpu_custom_call.1} parent=0
    #allocation2 [shape = 'u8[4096]{0}', space=vmem, size = 0x1000, scoped, tag = 'input window, operand 0, single buffered']
    #allocation3 [shape = 's32[1]{0}', space=sflag, size = 0x4, scoped, tag = 'scoped memory for tpu_custom_call.1']
    #allocation4 [shape = 's32[1]{0}', space=sflag, size = 0x4, scoped, tag = 'scoped memory for tpu_custom_call.1']
    #allocation5 [shape = 'u8[32768]{0}', space=vmem, size = 0x8000, scoped, tag = 'input window, operand 1, single buffered']
    #allocation6 [shape = 's32[1]{0}', space=sflag, size = 0x4, scoped, tag = 'scoped memory for tpu_custom_call.1']
    #allocation7 [shape = 'u8[16384]{0}', space=vmem, size = 0x4000, scoped, tag = 'input window, operand 2, single buffered']
    #allocation8 [shape = 'u8[32768]{0}', space=vmem, size = 0x8000, scoped, tag = 'input window, operand 3, single buffered']
    #allocation9 [shape = 's32[1]{0}', space=sflag, size = 0x4, scoped, tag = 'scoped memory for tpu_custom_call.1']
    #allocation10 [shape = 'u8[65536]{0}', space=vmem, size = 0x10000, scoped, tag = 'input window, operand 4, single buffered']
    #allocation11 [shape = 'u8[65536]{0}', space=vmem, size = 0x10000, scoped, tag = 'input window, operand 6, single buffered']
    #allocation12 [shape = 's32[1]{0}', space=sflag, size = 0x4, scoped, tag = 'scoped memory for tpu_custom_call.1']
    #allocation13 [shape = 'u8[8192]{0}', space=vmem, size = 0x2000, scoped, tag = 'output window, operand 0, single buffered']
    %13 = vsyncpa [#allocation3], 0
    %14 = vsyncpa [#allocation6], 0
    %15 = vsyncpa [#allocation9], 0
    %16 = vsyncpa [#allocation12], 0
    %17 = vsyncpa [#allocation4], 0
    // Predicated region
    $region2: #{tpu_custom_call.1} parent=1 // pred_check
      _
    $region3: #{tpu_custom_call.1} parent=1 // pred_check_branch
      %19 = sbr.rel (0) target = $region5
    $region4: #{tpu_custom_call.1} parent=1 // pred_region
      %21 = vsyncadd [#allocation3], 0
      %s22 = sshll.u32 %s0, 4
      %s23 = int_to_ptr.hbm [resolvable:$true] %s22
      %s24 = sshll.u32 [#allocation2], 4
      %s25 = int_to_ptr.vmem [resolvable:$true] %s24
      %30 = dma.hbm_to_vmem [thread:$0]  %s23, 128, %s25, [#allocation3], 64, 64, 4
    $region5: #{tpu_custom_call.1} parent=1 // pred_fallthru
      _
    // Predicated region
    $region6: #{tpu_custom_call.1} parent=1 // pred_check
      _
    $region7: #{tpu_custom_call.1} parent=1 // pred_check_branch
      %32 = sbr.rel (0) target = $region9
    $region8: #{tpu_custom_call.1} parent=1 // pred_region
      %34 = vsyncadd [#allocation6], 0
      %s35 = sshll.u32 %s1, 4
      %s36 = int_to_ptr.hbm [resolvable:$true] %s35
      %s37 = sshll.u32 [#allocation5], 4
      %s38 = int_to_ptr.vmem [resolvable:$true] %s37
      %43 = dma.hbm_to_vmem [thread:$0]  %s36, 1024, %s38, [#allocation6], 64, 64, 4
    $region9: #{tpu_custom_call.1} parent=1 // pred_fallthru
      _
    // Predicated region
    $region10: #{tpu_custom_call.1} parent=1 // pred_check
      _
    $region11: #{tpu_custom_call.1} parent=1 // pred_check_branch
      %45 = sbr.rel (0) target = $region13
    $region12: #{tpu_custom_call.1} parent=1 // pred_region
      %47 = vsyncadd [#allocation6], 0
      %s48 = sshll.u32 %s2, 4
      %s49 = int_to_ptr.hbm [resolvable:$true] %s48
      %s50 = sshll.u32 [#allocation7], 4
      %s51 = int_to_ptr.vmem [resolvable:$true] %s50
      %56 = dma.hbm_to_vmem [thread:$0]  %s49, 512, %s51, [#allocation6], 64, 64, 4
    $region13: #{tpu_custom_call.1} parent=1 // pred_fallthru
      _
    // Predicated region
    $region14: #{tpu_custom_call.1} parent=1 // pred_check
      _
    $region15: #{tpu_custom_call.1} parent=1 // pred_check_branch
      %58 = sbr.rel (0) target = $region17
    $region16: #{tpu_custom_call.1} parent=1 // pred_region
      %60 = vsyncadd [#allocation9], 0
      %s61 = sshll.u32 %s3, 4
      %s62 = int_to_ptr.hbm [resolvable:$true] %s61
      %s63 = sshll.u32 [#allocation8], 4
      %s64 = int_to_ptr.vmem [resolvable:$true] %s63
      %69 = dma.hbm_to_vmem [thread:$0]  %s62, 1024, %s64, [#allocation9], 64, 64, 4
    $region17: #{tpu_custom_call.1} parent=1 // pred_fallthru
      _
    // Predicated region
    $region18: #{tpu_custom_call.1} parent=1 // pred_check
      _
    $region19: #{tpu_custom_call.1} parent=1 // pred_check_branch
      %71 = sbr.rel (0) target = $region21
    $region20: #{tpu_custom_call.1} parent=1 // pred_region
      %73 = vsyncadd [#allocation9], 0
      %s74 = sshll.u32 %s4, 4
      %s75 = int_to_ptr.hbm [resolvable:$true] %s74
      %s76 = sshll.u32 [#allocation10], 4
      %s77 = int_to_ptr.vmem [resolvable:$true] %s76
      %82 = dma.hbm_to_vmem [thread:$0]  %s75, 2048, %s77, [#allocation9], 128, 128, 8
    $region21: #{tpu_custom_call.1} parent=1 // pred_fallthru
      _
    // Predicated region
    $region22: #{tpu_custom_call.1} parent=1 // pred_check
      _
    $region23: #{tpu_custom_call.1} parent=1 // pred_check_branch
      %84 = sbr.rel (0) target = $region25
    $region24: #{tpu_custom_call.1} parent=1 // pred_region
      _
    $region25: #{tpu_custom_call.1} parent=1 // pred_fallthru
      _
    // Predicated region
    $region26: #{tpu_custom_call.1} parent=1 // pred_check
      _
    $region27: #{tpu_custom_call.1} parent=1 // pred_check_branch
      %86 = sbr.rel (0) target = $region29
    $region28: #{tpu_custom_call.1} parent=1 // pred_region
      %88 = vsyncadd [#allocation12], 0
      %s89 = sshll.u32 %s6, 4
      %s90 = int_to_ptr.hbm [resolvable:$true] %s89
      %s91 = sshll.u32 [#allocation11], 4
      %s92 = int_to_ptr.vmem [resolvable:$true] %s91
      %97 = dma.hbm_to_vmem [thread:$0]  %s90, 2048, %s92, [#allocation12], 128, 128, 8
    $region29: #{tpu_custom_call.1} parent=1 // pred_fallthru
      _
    // Predicated region
    $region30: #{tpu_custom_call.1} parent=1 // pred_check
      _
    $region31: #{tpu_custom_call.1} parent=1 // pred_check_branch
      %99 = sbr.rel (0) target = $region33
    $region32: #{tpu_custom_call.1} parent=1 // pred_region
      _
    $region33: #{tpu_custom_call.1} parent=1 // pred_fallthru
      _
    // Predicated region
    $region34: #{tpu_custom_call.1} parent=1 // pred_check
      _
    $region35: #{tpu_custom_call.1} parent=1 // pred_check_branch
      %101 = sbr.rel (0) target = $region37
    $region36: #{tpu_custom_call.1} parent=1 // pred_region
      %103 = dma.done [#allocation3], 128
    $region37: #{tpu_custom_call.1} parent=1 // pred_fallthru
      _
    // Predicated region
    $region38: #{tpu_custom_call.1} parent=1 // pred_check
      _
    $region39: #{tpu_custom_call.1} parent=1 // pred_check_branch
      %105 = sbr.rel (0) target = $region41
    $region40: #{tpu_custom_call.1} parent=1 // pred_region
      %107 = dma.done [#allocation6], 1024
    $region41: #{tpu_custom_call.1} parent=1 // pred_fallthru
      _
    // Predicated region
    $region42: #{tpu_custom_call.1} parent=1 // pred_check
      _
    $region43: #{tpu_custom_call.1} parent=1 // pred_check_branch
      %109 = sbr.rel (0) target = $region45
    $region44: #{tpu_custom_call.1} parent=1 // pred_region
      %111 = dma.done [#allocation6], 512
    $region45: #{tpu_custom_call.1} parent=1 // pred_fallthru
      _
    // Predicated region
    $region46: #{tpu_custom_call.1} parent=1 // pred_check
      _
    $region47: #{tpu_custom_call.1} parent=1 // pred_check_branch
      %113 = sbr.rel (0) target = $region49
    $region48: #{tpu_custom_call.1} parent=1 // pred_region
      %115 = dma.done [#allocation9], 1024
    $region49: #{tpu_custom_call.1} parent=1 // pred_fallthru
      _
    // Predicated region
    $region50: #{tpu_custom_call.1} parent=1 // pred_check
      _
    $region51: #{tpu_custom_call.1} parent=1 // pred_check_branch
      %117 = sbr.rel (0) target = $region53
    $region52: #{tpu_custom_call.1} parent=1 // pred_region
      %119 = dma.done [#allocation9], 2048
    $region53: #{tpu_custom_call.1} parent=1 // pred_fallthru
      _
    // Predicated region
    $region54: #{tpu_custom_call.1} parent=1 // pred_check
      _
    $region55: #{tpu_custom_call.1} parent=1 // pred_check_branch
      %121 = sbr.rel (0) target = $region57
    $region56: #{tpu_custom_call.1} parent=1 // pred_region
      %123 = dma.done [#allocation12], 2048
    $region57: #{tpu_custom_call.1} parent=1 // pred_fallthru
      _
    %v125 = vld [vmem:[#allocation5] sm:$0xf]
    %v126 = vld [vmem:[#allocation5 + $0x4] sm:$0xf]
    %v127 = vld [vmem:[#allocation5 + $0x8] sm:$0xf]
    %v128 = vld [vmem:[#allocation5 + $0xc] sm:$0xf]
    %v129 = vld [vmem:[#allocation5 + $0x10] sm:$0xf]
    %v130 = vld [vmem:[#allocation5 + $0x14] sm:$0xf]
    %v131 = vld [vmem:[#allocation5 + $0x18] sm:$0xf]
    %v132 = vld [vmem:[#allocation5 + $0x1c] sm:$0xf]
    %v133 = vld [vmem:[#allocation5 + $0x20] sm:$0xf]
    %v134 = vld [vmem:[#allocation5 + $0x24] sm:$0xf]
    %v135 = vld [vmem:[#allocation5 + $0x28] sm:$0xf]
    %v136 = vld [vmem:[#allocation5 + $0x2c] sm:$0xf]
    %v137 = vld [vmem:[#allocation5 + $0x30] sm:$0xf]
    %v138 = vld [vmem:[#allocation5 + $0x34] sm:$0xf]
    %v139 = vld [vmem:[#allocation5 + $0x38] sm:$0xf]
    %v140 = vld [vmem:[#allocation5 + $0x3c] sm:$0xf]
    %v141 = vunpack.c.l.bf16 %v125
    %v142 = vunpack.c.l.bf16 %v126
    %v143 = vunpack.c.l.bf16 %v127
    %v144 = vunpack.c.l.bf16 %v128
    %v145 = vunpack.c.l.bf16 %v129
    %v146 = vunpack.c.l.bf16 %v130
    %v147 = vunpack.c.l.bf16 %v131
    %v148 = vunpack.c.l.bf16 %v132
    %v149 = vunpack.c.l.bf16 %v133
    %v150 = vunpack.c.l.bf16 %v134
    %v151 = vunpack.c.l.bf16 %v135
    %v152 = vunpack.c.l.bf16 %v136
    %v153 = vunpack.c.l.bf16 %v137
    %v154 = vunpack.c.l.bf16 %v138
    %v155 = vunpack.c.l.bf16 %v139
    %v156 = vunpack.c.l.bf16 %v140
    %v157 = vrot.slane %v141, 4
    %v158 = vmax.f32 %v141, %v157
    %v159 = vrot.slane %v158, 2
    %v160 = vmax.f32 %v158, %v159
    %v161 = vrot.slane %v160, 1
    %v162 = vmax.f32 %v160, %v161
    %v163 = vrot.slane %v142, 4
    %v164 = vmax.f32 %v142, %v163
    %v165 = vrot.slane %v164, 2
    %v166 = vmax.f32 %v164, %v165
    %v167 = vrot.slane %v166, 1
    %v168 = vmax.f32 %v166, %v167
    %v169 = vrot.slane %v143, 4
    %v170 = vmax.f32 %v143, %v169
    %v171 = vrot.slane %v170, 2
    %v172 = vmax.f32 %v170, %v171
    %v173 = vrot.slane %v172, 1
    %v174 = vmax.f32 %v172, %v173
    %v175 = vrot.slane %v144, 4
    %v176 = vmax.f32 %v144, %v175
    %v177 = vrot.slane %v176, 2
    %v178 = vmax.f32 %v176, %v177
    %v179 = vrot.slane %v178, 1
    %v180 = vmax.f32 %v178, %v179
    %v181 = vrot.slane %v145, 4
    %v182 = vmax.f32 %v145, %v181
    %v183 = vrot.slane %v182, 2
    %v184 = vmax.f32 %v182, %v183
    %v185 = vrot.slane %v184, 1
    %v186 = vmax.f32 %v184, %v185
    %v187 = vrot.slane %v146, 4
    %v188 = vmax.f32 %v146, %v187
    %v189 = vrot.slane %v188, 2
    %v190 = vmax.f32 %v188, %v189
    %v191 = vrot.slane %v190, 1
    %v192 = vmax.f32 %v190, %v191
    %v193 = vrot.slane %v147, 4
    %v194 = vmax.f32 %v147, %v193
    %v195 = vrot.slane %v194, 2
    %v196 = vmax.f32 %v194, %v195
    %v197 = vrot.slane %v196, 1
    %v198 = vmax.f32 %v196, %v197
    %v199 = vrot.slane %v148, 4
    %v200 = vmax.f32 %v148, %v199
    %v201 = vrot.slane %v200, 2
    %v202 = vmax.f32 %v200, %v201
    %v203 = vrot.slane %v202, 1
    %v204 = vmax.f32 %v202, %v203
    %v205 = vrot.slane %v149, 4
    %v206 = vmax.f32 %v149, %v205
    %v207 = vrot.slane %v206, 2
    %v208 = vmax.f32 %v206, %v207
    %v209 = vrot.slane %v208, 1
    %v210 = vmax.f32 %v208, %v209
    %v211 = vrot.slane %v150, 4
    %v212 = vmax.f32 %v150, %v211
    %v213 = vrot.slane %v212, 2
    %v214 = vmax.f32 %v212, %v213
    %v215 = vrot.slane %v214, 1
    %v216 = vmax.f32 %v214, %v215
    %v217 = vrot.slane %v151, 4
    %v218 = vmax.f32 %v151, %v217
    %v219 = vrot.slane %v218, 2
    %v220 = vmax.f32 %v218, %v219
    %v221 = vrot.slane %v220, 1
    %v222 = vmax.f32 %v220, %v221
    %v223 = vrot.slane %v152, 4
    %v224 = vmax.f32 %v152, %v223
    %v225 = vrot.slane %v224, 2
    %v226 = vmax.f32 %v224, %v225
    %v227 = vrot.slane %v226, 1
    %v228 = vmax.f32 %v226, %v227
    %v229 = vrot.slane %v153, 4
    %v230 = vmax.f32 %v153, %v229
    %v231 = vrot.slane %v230, 2
    %v232 = vmax.f32 %v230, %v231
    %v233 = vrot.slane %v232, 1
    %v234 = vmax.f32 %v232, %v233
    %v235 = vrot.slane %v154, 4
    %v236 = vmax.f32 %v154, %v235
    %v237 = vrot.slane %v236, 2
    %v238 = vmax.f32 %v236, %v237
    %v239 = vrot.slane %v238, 1
    %v240 = vmax.f32 %v238, %v239
    %v241 = vrot.slane %v155, 4
    %v242 = vmax.f32 %v155, %v241
    %v243 = vrot.slane %v242, 2
    %v244 = vmax.f32 %v242, %v243
    %v245 = vrot.slane %v244, 1
    %v246 = vmax.f32 %v244, %v245
    %v247 = vrot.slane %v156, 4
    %v248 = vmax.f32 %v156, %v247
    %v249 = vrot.slane %v248, 2
    %v250 = vmax.f32 %v248, %v249
    %v251 = vrot.slane %v250, 1
    %v252 = vmax.f32 %v250, %v251
    %v253 = vpack.c.bf16 %v162, %v162
    %v254 = vpack.c.bf16 %v168, %v168
    %v255 = vpack.c.bf16 %v174, %v174
    %v256 = vpack.c.bf16 %v180, %v180
    %v257 = vpack.c.bf16 %v186, %v186
    %v258 = vpack.c.bf16 %v192, %v192
    %v259 = vpack.c.bf16 %v198, %v198
    %v260 = vpack.c.bf16 %v204, %v204
    %v261 = vpack.c.bf16 %v210, %v210
    %v262 = vpack.c.bf16 %v216, %v216
    %v263 = vpack.c.bf16 %v222, %v222
    %v264 = vpack.c.bf16 %v228, %v228
    %v265 = vpack.c.bf16 %v234, %v234
    %v266 = vpack.c.bf16 %v240, %v240
    %v267 = vpack.c.bf16 %v246, %v246
    %v268 = vpack.c.bf16 %v252, %v252
    %v269 = vunpack.c.l.bf16 %v253
    %v270 = vunpack.c.l.bf16 %v254
    %v271 = vunpack.c.l.bf16 %v255
    %v272 = vunpack.c.l.bf16 %v256
    %v273 = vunpack.c.l.bf16 %v257
    %v274 = vunpack.c.l.bf16 %v258
    %v275 = vunpack.c.l.bf16 %v259
    %v276 = vunpack.c.l.bf16 %v260
    %v277 = vunpack.c.l.bf16 %v261
    %v278 = vunpack.c.l.bf16 %v262
    %v279 = vunpack.c.l.bf16 %v263
    %v280 = vunpack.c.l.bf16 %v264
    %v281 = vunpack.c.l.bf16 %v265
    %v282 = vunpack.c.l.bf16 %v266
    %v283 = vunpack.c.l.bf16 %v267
    %v284 = vunpack.c.l.bf16 %v268
    %vm301 = vcmask 1041409
    %v302 = vsel %vm301, %v270, %v269
    %vm303 = vcmask 1042434
    %v304 = vsel %vm303, %v271, %v302
    %vm305 = vcmask 1043459
    %v306 = vsel %vm305, %v272, %v304
    %vm307 = vcmask 1044484
    %v308 = vsel %vm307, %v273, %v306
    %vm309 = vcmask 1045509
    %v310 = vsel %vm309, %v274, %v308
    %vm311 = vcmask 1046534
    %v312 = vsel %vm311, %v275, %v310
    %vm313 = vcmask 1047559
    %v314 = vsel %vm313, %v276, %v312
    %v315 = vsel %vm301, %v278, %v277
    %v316 = vsel %vm303, %v279, %v315
    %v317 = vsel %vm305, %v280, %v316
    %v318 = vsel %vm307, %v281, %v317
    %v319 = vsel %vm309, %v282, %v318
    %v320 = vsel %vm311, %v283, %v319
    %v321 = vsel %vm313, %v284, %v320
    %324 = vrot.lane.b32.xlu0 %v314, 64
    %v325 = vpop.permute.xlu0 %324
    %326 = vrot.lane.b32.xlu0 %v321, 64
    %v327 = vpop.permute.xlu0 %326
    %v330 = vrot.slane %v325, 1
    %v331 = vrot.slane %v325, 2
    %v332 = vrot.slane %v325, 3
    %v333 = vrot.slane %v325, 4
    %v334 = vrot.slane %v325, 5
    %v335 = vrot.slane %v325, 6
    %v336 = vrot.slane %v325, 7
    %v337 = vrot.slane %v327, 1
    %v338 = vrot.slane %v327, 2
    %v339 = vrot.slane %v327, 3
    %v340 = vrot.slane %v327, 4
    %v341 = vrot.slane %v327, 5
    %v342 = vrot.slane %v327, 6
    %v343 = vrot.slane %v327, 7
    %v360 = vmax.f32 %v269, %v325
    %v361 = vmax.f32 %v270, %v330
    %v362 = vmax.f32 %v271, %v331
    %v363 = vmax.f32 %v272, %v332
    %v364 = vmax.f32 %v273, %v333
    %v365 = vmax.f32 %v274, %v334
    %v366 = vmax.f32 %v275, %v335
    %v367 = vmax.f32 %v276, %v336
    %v368 = vmax.f32 %v277, %v327
    %v369 = vmax.f32 %v278, %v337
    %v370 = vmax.f32 %v279, %v338
    %v371 = vmax.f32 %v280, %v339
    %v372 = vmax.f32 %v281, %v340
    %v373 = vmax.f32 %v282, %v341
    %v374 = vmax.f32 %v283, %v342
    %v375 = vmax.f32 %v284, %v343
    %v376 = vpack.c.bf16 %v360, %v360
    %v377 = vpack.c.bf16 %v361, %v361
    %v378 = vpack.c.bf16 %v362, %v362
    %v379 = vpack.c.bf16 %v363, %v363
    %v380 = vpack.c.bf16 %v364, %v364
    %v381 = vpack.c.bf16 %v365, %v365
    %v382 = vpack.c.bf16 %v366, %v366
    %v383 = vpack.c.bf16 %v367, %v367
    %v384 = vpack.c.bf16 %v368, %v368
    %v385 = vpack.c.bf16 %v369, %v369
    %v386 = vpack.c.bf16 %v370, %v370
    %v387 = vpack.c.bf16 %v371, %v371
    %v388 = vpack.c.bf16 %v372, %v372
    %v389 = vpack.c.bf16 %v373, %v373
    %v390 = vpack.c.bf16 %v374, %v374
    %v391 = vpack.c.bf16 %v375, %v375
    %v392 = vld [vmem:[#allocation2] sm:$0xf]
    %v393 = vld [vmem:[#allocation2 + $0x4] sm:$0xf]
    %v394 = vld [vmem:[#allocation7] sm:$0xf]
    %v395 = vld [vmem:[#allocation7 + $0x4] sm:$0xf]
    %v396 = vld [vmem:[#allocation7 + $0x8] sm:$0xf]
    %v397 = vld [vmem:[#allocation7 + $0xc] sm:$0xf]
    %v398 = vld [vmem:[#allocation7 + $0x10] sm:$0xf]
    %v399 = vld [vmem:[#allocation7 + $0x14] sm:$0xf]
    %v400 = vld [vmem:[#allocation7 + $0x18] sm:$0xf]
    %v401 = vld [vmem:[#allocation7 + $0x1c] sm:$0xf]
    %v402 = vld [vmem:[#allocation8] sm:$0xf]
    %v403 = vld [vmem:[#allocation8 + $0x4] sm:$0xf]
    %v404 = vld [vmem:[#allocation8 + $0x8] sm:$0xf]
    %v405 = vld [vmem:[#allocation8 + $0xc] sm:$0xf]
    %v406 = vld [vmem:[#allocation8 + $0x10] sm:$0xf]
    %v407 = vld [vmem:[#allocation8 + $0x14] sm:$0xf]
    %v408 = vld [vmem:[#allocation8 + $0x18] sm:$0xf]
    %v409 = vld [vmem:[#allocation8 + $0x1c] sm:$0xf]
    %v410 = vld [vmem:[#allocation8 + $0x20] sm:$0xf]
    %v411 = vld [vmem:[#allocation8 + $0x24] sm:$0xf]
    %v412 = vld [vmem:[#allocation8 + $0x28] sm:$0xf]
    %v413 = vld [vmem:[#allocation8 + $0x2c] sm:$0xf]
    %v414 = vld [vmem:[#allocation8 + $0x30] sm:$0xf]
    %v415 = vld [vmem:[#allocation8 + $0x34] sm:$0xf]
    %v416 = vld [vmem:[#allocation8 + $0x38] sm:$0xf]
    %v417 = vld [vmem:[#allocation8 + $0x3c] sm:$0xf]
    %v434 = vunpack.c.l.b16 %v376
    %v435 = vunpack.c.l.b16 %v377
    %v436 = vunpack.c.l.b16 %v378
    %v437 = vunpack.c.l.b16 %v379
    %v438 = vunpack.c.l.b16 %v380
    %v439 = vunpack.c.l.b16 %v381
    %v440 = vunpack.c.l.b16 %v382
    %v441 = vunpack.c.l.b16 %v383
    %v442 = vunpack.c.l.b16 %v384
    %v443 = vunpack.c.l.b16 %v385
    %v444 = vunpack.c.l.b16 %v386
    %v445 = vunpack.c.l.b16 %v387
    %v446 = vunpack.c.l.b16 %v388
    %v447 = vunpack.c.l.b16 %v389
    %v448 = vunpack.c.l.b16 %v390
    %v449 = vunpack.c.l.b16 %v391
    %v450 = vrot.slane %v435, 7
    %v451 = vsel %vm301, %v450, %v434
    %v452 = vrot.slane %v436, 6
    %v453 = vsel %vm303, %v452, %v451
    %v454 = vrot.slane %v437, 5
    %v455 = vsel %vm305, %v454, %v453
    %v456 = vrot.slane %v438, 4
    %v457 = vsel %vm307, %v456, %v455
    %v458 = vrot.slane %v439, 3
    %v459 = vsel %vm309, %v458, %v457
    %v460 = vrot.slane %v440, 2
    %v461 = vsel %vm311, %v460, %v459
    %v462 = vrot.slane %v441, 1
    %v463 = vsel %vm313, %v462, %v461
    %v464 = vrot.slane %v443, 7
    %v465 = vsel %vm301, %v464, %v442
    %v466 = vrot.slane %v444, 6
    %v467 = vsel %vm303, %v466, %v465
    %v468 = vrot.slane %v445, 5
    %v469 = vsel %vm305, %v468, %v467
    %v470 = vrot.slane %v446, 4
    %v471 = vsel %vm307, %v470, %v469
    %v472 = vrot.slane %v447, 3
    %v473 = vsel %vm309, %v472, %v471
    %v474 = vrot.slane %v448, 2
    %v475 = vsel %vm311, %v474, %v473
    %v476 = vrot.slane %v449, 1
    %v477 = vsel %vm313, %v476, %v475
    %v478 = vpack.c.b16 %v477, %v463
    %v496 = vunpack.c.l.b16 %v402
    %v497 = vunpack.c.l.b16 %v403
    %v498 = vunpack.c.l.b16 %v404
    %v499 = vunpack.c.l.b16 %v405
    %v500 = vunpack.c.l.b16 %v406
    %v501 = vunpack.c.l.b16 %v407
    %v502 = vunpack.c.l.b16 %v408
    %v503 = vunpack.c.l.b16 %v409
    %v504 = vunpack.c.l.b16 %v410
    %v505 = vunpack.c.l.b16 %v411
    %v506 = vunpack.c.l.b16 %v412
    %v507 = vunpack.c.l.b16 %v413
    %v508 = vunpack.c.l.b16 %v414
    %v509 = vunpack.c.l.b16 %v415
    %v510 = vunpack.c.l.b16 %v416
    %v511 = vunpack.c.l.b16 %v417
    %v512 = vpack.c.b16 %v497, %v496
    %v513 = vpack.c.b16 %v499, %v498
    %v514 = vpack.c.b16 %v501, %v500
    %v515 = vpack.c.b16 %v503, %v502
    %v516 = vpack.c.b16 %v505, %v504
    %v517 = vpack.c.b16 %v507, %v506
    %v518 = vpack.c.b16 %v509, %v508
    %v519 = vpack.c.b16 %v511, %v510
    %528 = vmatpush.bf16.msra.mxu0 %v519
    %529 = vmatpush.bf16.msra.mxu0 %v518
    %530 = vmatpush.bf16.msra.mxu0 %v517
    %531 = vmatpush.bf16.msra.mxu0 %v516
    %532 = vmatpush.bf16.msra.mxu0 %v515
    %533 = vmatpush.bf16.msra.mxu0 %v514
    %534 = vmatpush.bf16.msra.mxu0 %v513
    %535 = vmatpush.bf16.msra.mxu0 %v512
    %536 = vmatmul.bf16.gmra.mxu0 %v478
    %v537 = vpop.f32.mrf.mxu0
    %v538 = vadd.f32 0.0, %v537
    %v539 = vpop.f32.mrf.mxu0
    %v540 = vadd.f32 0.0, %v539
    %541 = vdwg.mxu0
    %v544 = vunpack.c.l.b16 %v392
    %v545 = vunpack.c.l.b16 %v393
    %v546 = vpack.c.b16 %v545, %v544
    %v555 = vunpack.c.l.b16 %v394
    %v556 = vunpack.c.l.b16 %v395
    %v557 = vunpack.c.l.b16 %v396
    %v558 = vunpack.c.l.b16 %v397
    %v559 = vunpack.c.l.b16 %v398
    %v560 = vunpack.c.l.b16 %v399
    %v561 = vunpack.c.l.b16 %v400
    %v562 = vunpack.c.l.b16 %v401
    %v563 = vpack.c.b16 %v556, %v555
    %v564 = vpack.c.b16 %v558, %v557
    %v565 = vpack.c.b16 %v560, %v559
    %v566 = vpack.c.b16 %v562, %v561
    %vm571 = vcmask 523264
    %v573 = vsel %vm571, %v546, 0
    %575 = vmatpush.bf16.msra.mxu0 0
    %576 = vmatpush.bf16.msra.mxu0 0
    %577 = vmatpush.bf16.msra.mxu0 0
    %578 = vmatpush.bf16.msra.mxu0 0
    %579 = vmatpush.bf16.msra.mxu0 %v566
    %580 = vmatpush.bf16.msra.mxu0 %v565
    %581 = vmatpush.bf16.msra.mxu0 %v564
    %582 = vmatpush.bf16.msra.mxu0 %v563
    %583 = vmatmul.bf16.gmra.mxu0 %v573
    %v584 = vpop.f32.mrf.mxu0
    %v585 = vadd.f32 %v538, %v584
    %v586 = vpop.f32.mrf.mxu0
    %v587 = vadd.f32 %v540, %v586
    %588 = vdwg.mxu0
    %v589 = vpack.c.bf16 %v587, %v585
    %v590 = vld [vmem:[#allocation10] sm:$0xff]
    %v591 = vld [vmem:[#allocation10 + $0x8] sm:$0xff]
    %v592 = vld [vmem:[#allocation10 + $0x10] sm:$0xff]
    %v593 = vld [vmem:[#allocation10 + $0x18] sm:$0xff]
    %v594 = vld [vmem:[#allocation10 + $0x20] sm:$0xff]
    %v595 = vld [vmem:[#allocation10 + $0x28] sm:$0xff]
    %v596 = vld [vmem:[#allocation10 + $0x30] sm:$0xff]
    %v597 = vld [vmem:[#allocation10 + $0x38] sm:$0xff]
    %v598 = vld [vmem:[#allocation10 + $0x40] sm:$0xff]
    %v599 = vld [vmem:[#allocation10 + $0x48] sm:$0xff]
    %v600 = vld [vmem:[#allocation10 + $0x50] sm:$0xff]
    %v601 = vld [vmem:[#allocation10 + $0x58] sm:$0xff]
    %v602 = vld [vmem:[#allocation10 + $0x60] sm:$0xff]
    %v603 = vld [vmem:[#allocation10 + $0x68] sm:$0xff]
    %v604 = vld [vmem:[#allocation10 + $0x70] sm:$0xff]
    %v605 = vld [vmem:[#allocation10 + $0x78] sm:$0xff]
    %v606 = vld [vmem:[%s5] sm:$0x3]
    %v608 = vperm.slane %v606, 0
    %v609 = vperm.slane %v606, 1
    %v628 = vunpack.c.l.b16 %v590
    %v629 = vunpack.c.h.b16 %v590
    %v630 = vunpack.c.l.b16 %v591
    %v631 = vunpack.c.h.b16 %v591
    %v632 = vunpack.c.l.b16 %v592
    %v633 = vunpack.c.h.b16 %v592
    %v634 = vunpack.c.l.b16 %v593
    %v635 = vunpack.c.h.b16 %v593
    %v636 = vunpack.c.l.b16 %v594
    %v637 = vunpack.c.h.b16 %v594
    %v638 = vunpack.c.l.b16 %v595
    %v639 = vunpack.c.h.b16 %v595
    %v640 = vunpack.c.l.b16 %v596
    %v641 = vunpack.c.h.b16 %v596
    %v642 = vunpack.c.l.b16 %v597
    %v643 = vunpack.c.h.b16 %v597
    %v644 = vunpack.c.l.b16 %v598
    %v645 = vunpack.c.h.b16 %v598
    %v646 = vunpack.c.l.b16 %v599
    %v647 = vunpack.c.h.b16 %v599
    %v648 = vunpack.c.l.b16 %v600
    %v649 = vunpack.c.h.b16 %v600
    %v650 = vunpack.c.l.b16 %v601
    %v651 = vunpack.c.h.b16 %v601
    %v652 = vunpack.c.l.b16 %v602
    %v653 = vunpack.c.h.b16 %v602
    %v654 = vunpack.c.l.b16 %v603
    %v655 = vunpack.c.h.b16 %v603
    %v656 = vunpack.c.l.b16 %v604
    %v657 = vunpack.c.h.b16 %v604
    %v658 = vunpack.c.l.b16 %v605
    %v659 = vunpack.c.h.b16 %v605
    %v660 = vpack.c.b16 %v630, %v628
    %v661 = vpack.c.b16 %v631, %v629
    %v662 = vpack.c.b16 %v634, %v632
    %v663 = vpack.c.b16 %v635, %v633
    %v664 = vpack.c.b16 %v638, %v636
    %v665 = vpack.c.b16 %v639, %v637
    %v666 = vpack.c.b16 %v642, %v640
    %v667 = vpack.c.b16 %v643, %v641
    %v668 = vpack.c.b16 %v646, %v644
    %v669 = vpack.c.b16 %v647, %v645
    %v670 = vpack.c.b16 %v650, %v648
    %v671 = vpack.c.b16 %v651, %v649
    %v672 = vpack.c.b16 %v654, %v652
    %v673 = vpack.c.b16 %v655, %v653
    %v674 = vpack.c.b16 %v658, %v656
    %v675 = vpack.c.b16 %v659, %v657
    %692 = vmatpush.bf16.msra.mxu0 %v674
    %693 = vmatpush.bf16.msra.mxu0 %v672
    %694 = vmatpush.bf16.msra.mxu0 %v670
    %695 = vmatpush.bf16.msra.mxu0 %v668
    %696 = vmatpush.bf16.msra.mxu0 %v666
    %697 = vmatpush.bf16.msra.mxu0 %v664
    %698 = vmatpush.bf16.msra.mxu0 %v662
    %699 = vmatpush.bf16.msra.mxu0 %v660
    %700 = vmatmul.bf16.gmra.mxu0 %v589
    %v701 = vpop.f32.mrf.mxu0
    %v702 = vadd.f32 %v608, %v701
    %v703 = vpop.f32.mrf.mxu0
    %v704 = vadd.f32 %v608, %v703
    %705 = vdwg.mxu0
    %706 = vmatpush.bf16.msra.mxu0 %v675
    %707 = vmatpush.bf16.msra.mxu0 %v673
    %708 = vmatpush.bf16.msra.mxu0 %v671
    %709 = vmatpush.bf16.msra.mxu0 %v669
    %710 = vmatpush.bf16.msra.mxu0 %v667
    %711 = vmatpush.bf16.msra.mxu0 %v665
    %712 = vmatpush.bf16.msra.mxu0 %v663
    %713 = vmatpush.bf16.msra.mxu0 %v661
    %714 = vmatmul.bf16.gmra.mxu0 %v589
    %v715 = vpop.f32.mrf.mxu0
    %v716 = vadd.f32 %v609, %v715
    %v717 = vpop.f32.mrf.mxu0
    %v718 = vadd.f32 %v609, %v717
    %719 = vdwg.mxu0
    %v720 = vxor.u32 %v702, 2147483648
    %v721 = vxor.u32 %v704, 2147483648
    %v722 = vmul.f32 %v720, 1.442695
    %v723 = vpow.pop %v722
    %v724 = vmul.f32 %v721, 1.442695
    %v725 = vpow.pop %v724
    %v726 = vadd.f32 %v723, 1.0
    %v727 = vadd.f32 %v725, 1.0
    %v728 = vrcp.pop %v726
    %v729 = vmul.f32 %v726, %v728
    %v730 = vsub.f32 1.0, %v729
    %v731 = vmul.f32 %v728, %v730
    %v732 = vadd.f32 %v728, %v731
    %vm733 = vweird.f32 %v726
    %vm734 = vweird.f32 %v728
    %vm735 = vmor %vm733, %vm734
    %v736 = vsel %vm735, %v728, %v732
    %v737 = vand.u32 2147483647, %v726
    %vm738 = vcmp.eq.f32.partialorder %v737, 8.507059e+37
    %v739 = vand.u32 %v726, 2147483648
    %v740 = vor.u32 1.1754944e-38, %v739
    %v741 = vsel %vm738, %v740, %v736
    %v742 = vmul.f32 1.0, %v741
    %v743 = vrcp.pop %v727
    %v744 = vmul.f32 %v727, %v743
    %v745 = vsub.f32 1.0, %v744
    %v746 = vmul.f32 %v743, %v745
    %v747 = vadd.f32 %v743, %v746
    %vm748 = vweird.f32 %v727
    %vm749 = vweird.f32 %v743
    %vm750 = vmor %vm748, %vm749
    %v751 = vsel %vm750, %v743, %v747
    %v752 = vand.u32 2147483647, %v727
    %vm753 = vcmp.eq.f32.partialorder %v752, 8.507059e+37
    %v754 = vand.u32 %v727, 2147483648
    %v755 = vor.u32 1.1754944e-38, %v754
    %v756 = vsel %vm753, %v755, %v751
    %v757 = vmul.f32 1.0, %v756
    %v758 = vmax.f32 %v716, 0.0
    %v759 = vmax.f32 %v718, 0.0
    %v760 = vsub.f32 %v758, %v585
    %v761 = vsub.f32 %v759, %v587
    %v762 = vmul.f32 %v742, %v760
    %v763 = vmul.f32 %v757, %v761
    %v764 = vadd.f32 %v585, %v762
    %v765 = vadd.f32 %v587, %v763
    %v766 = vpack.c.bf16 %v765, %v764
    %v767 = vld [vmem:[#allocation11] sm:$0xff]
    %v768 = vld [vmem:[#allocation11 + $0x8] sm:$0xff]
    %v769 = vld [vmem:[#allocation11 + $0x10] sm:$0xff]
    %v770 = vld [vmem:[#allocation11 + $0x18] sm:$0xff]
    %v771 = vld [vmem:[#allocation11 + $0x20] sm:$0xff]
    %v772 = vld [vmem:[#allocation11 + $0x28] sm:$0xff]
    %v773 = vld [vmem:[#allocation11 + $0x30] sm:$0xff]
    %v774 = vld [vmem:[#allocation11 + $0x38] sm:$0xff]
    %v775 = vld [vmem:[#allocation11 + $0x40] sm:$0xff]
    %v776 = vld [vmem:[#allocation11 + $0x48] sm:$0xff]
    %v777 = vld [vmem:[#allocation11 + $0x50] sm:$0xff]
    %v778 = vld [vmem:[#allocation11 + $0x58] sm:$0xff]
    %v779 = vld [vmem:[#allocation11 + $0x60] sm:$0xff]
    %v780 = vld [vmem:[#allocation11 + $0x68] sm:$0xff]
    %v781 = vld [vmem:[#allocation11 + $0x70] sm:$0xff]
    %v782 = vld [vmem:[#allocation11 + $0x78] sm:$0xff]
    %v783 = vld [vmem:[%s7] sm:$0x3]
    %v785 = vperm.slane %v783, 0
    %v786 = vperm.slane %v783, 1
    %v805 = vunpack.c.l.b16 %v767
    %v806 = vunpack.c.h.b16 %v767
    %v807 = vunpack.c.l.b16 %v768
    %v808 = vunpack.c.h.b16 %v768
    %v809 = vunpack.c.l.b16 %v769
    %v810 = vunpack.c.h.b16 %v769
    %v811 = vunpack.c.l.b16 %v770
    %v812 = vunpack.c.h.b16 %v770
    %v813 = vunpack.c.l.b16 %v771
    %v814 = vunpack.c.h.b16 %v771
    %v815 = vunpack.c.l.b16 %v772
    %v816 = vunpack.c.h.b16 %v772
    %v817 = vunpack.c.l.b16 %v773
    %v818 = vunpack.c.h.b16 %v773
    %v819 = vunpack.c.l.b16 %v774
    %v820 = vunpack.c.h.b16 %v774
    %v821 = vunpack.c.l.b16 %v775
    %v822 = vunpack.c.h.b16 %v775
    %v823 = vunpack.c.l.b16 %v776
    %v824 = vunpack.c.h.b16 %v776
    %v825 = vunpack.c.l.b16 %v777
    %v826 = vunpack.c.h.b16 %v777
    %v827 = vunpack.c.l.b16 %v778
    %v828 = vunpack.c.h.b16 %v778
    %v829 = vunpack.c.l.b16 %v779
    %v830 = vunpack.c.h.b16 %v779
    %v831 = vunpack.c.l.b16 %v780
    %v832 = vunpack.c.h.b16 %v780
    %v833 = vunpack.c.l.b16 %v781
    %v834 = vunpack.c.h.b16 %v781
    %v835 = vunpack.c.l.b16 %v782
    %v836 = vunpack.c.h.b16 %v782
    %v837 = vpack.c.b16 %v807, %v805
    %v838 = vpack.c.b16 %v808, %v806
    %v839 = vpack.c.b16 %v811, %v809
    %v840 = vpack.c.b16 %v812, %v810
    %v841 = vpack.c.b16 %v815, %v813
    %v842 = vpack.c.b16 %v816, %v814
    %v843 = vpack.c.b16 %v819, %v817
    %v844 = vpack.c.b16 %v820, %v818
    %v845 = vpack.c.b16 %v823, %v821
    %v846 = vpack.c.b16 %v824, %v822
    %v847 = vpack.c.b16 %v827, %v825
    %v848 = vpack.c.b16 %v828, %v826
    %v849 = vpack.c.b16 %v831, %v829
    %v850 = vpack.c.b16 %v832, %v830
    %v851 = vpack.c.b16 %v835, %v833
    %v852 = vpack.c.b16 %v836, %v834
    %869 = vmatpush.bf16.msra.mxu0 %v851
    %870 = vmatpush.bf16.msra.mxu0 %v849
    %871 = vmatpush.bf16.msra.mxu0 %v847
    %872 = vmatpush.bf16.msra.mxu0 %v845
    %873 = vmatpush.bf16.msra.mxu0 %v843
    %874 = vmatpush.bf16.msra.mxu0 %v841
    %875 = vmatpush.bf16.msra.mxu0 %v839
    %876 = vmatpush.bf16.msra.mxu0 %v837
    %877 = vmatmul.bf16.gmra.mxu0 %v766
    %v878 = vpop.f32.mrf.mxu0
    %v879 = vadd.f32 %v785, %v878
    %v880 = vpop.f32.mrf.mxu0
    %v881 = vadd.f32 %v785, %v880
    %882 = vdwg.mxu0
    %883 = vmatpush.bf16.msra.mxu0 %v852
    %884 = vmatpush.bf16.msra.mxu0 %v850
    %885 = vmatpush.bf16.msra.mxu0 %v848
    %886 = vmatpush.bf16.msra.mxu0 %v846
    %887 = vmatpush.bf16.msra.mxu0 %v844
    %888 = vmatpush.bf16.msra.mxu0 %v842
    %889 = vmatpush.bf16.msra.mxu0 %v840
    %890 = vmatpush.bf16.msra.mxu0 %v838
    %891 = vmatmul.bf16.gmra.mxu0 %v766
    %v892 = vpop.f32.mrf.mxu0
    %v893 = vadd.f32 %v786, %v892
    %v894 = vpop.f32.mrf.mxu0
    %v895 = vadd.f32 %v786, %v894
    %896 = vdwg.mxu0
    %v897 = vxor.u32 %v879, 2147483648
    %v898 = vxor.u32 %v881, 2147483648
    %v899 = vmul.f32 %v897, 1.442695
    %v900 = vpow.pop %v899
    %v901 = vmul.f32 %v898, 1.442695
    %v902 = vpow.pop %v901
    %v903 = vadd.f32 %v900, 1.0
    %v904 = vadd.f32 %v902, 1.0
    %v905 = vrcp.pop %v903
    %v906 = vmul.f32 %v903, %v905
    %v907 = vsub.f32 1.0, %v906
    %v908 = vmul.f32 %v905, %v907
    %v909 = vadd.f32 %v905, %v908
    %vm910 = vweird.f32 %v903
    %vm911 = vweird.f32 %v905
    %vm912 = vmor %vm910, %vm911
    %v913 = vsel %vm912, %v905, %v909
    %v914 = vand.u32 2147483647, %v903
    %vm915 = vcmp.eq.f32.partialorder %v914, 8.507059e+37
    %v916 = vand.u32 %v903, 2147483648
    %v917 = vor.u32 1.1754944e-38, %v916
    %v918 = vsel %vm915, %v917, %v913
    %v919 = vmul.f32 1.0, %v918
    %v920 = vrcp.pop %v904
    %v921 = vmul.f32 %v904, %v920
    %v922 = vsub.f32 1.0, %v921
    %v923 = vmul.f32 %v920, %v922
    %v924 = vadd.f32 %v920, %v923
    %vm925 = vweird.f32 %v904
    %vm926 = vweird.f32 %v920
    %vm927 = vmor %vm925, %vm926
    %v928 = vsel %vm927, %v920, %v924
    %v929 = vand.u32 2147483647, %v904
    %vm930 = vcmp.eq.f32.partialorder %v929, 8.507059e+37
    %v931 = vand.u32 %v904, 2147483648
    %v932 = vor.u32 1.1754944e-38, %v931
    %v933 = vsel %vm930, %v932, %v928
    %v934 = vmul.f32 1.0, %v933
    %v935 = vmax.f32 %v893, 0.0
    %v936 = vmax.f32 %v895, 0.0
    %v937 = vsub.f32 %v935, %v764
    %v938 = vsub.f32 %v936, %v765
    %v939 = vmul.f32 %v919, %v937
    %v940 = vmul.f32 %v934, %v938
    %v941 = vadd.f32 %v764, %v939
    %v942 = vadd.f32 %v765, %v940
    %943 = vst [vmem:[#allocation13] sm:$0xff] %v941
    %944 = vst [vmem:[#allocation13 + $0x8] sm:$0xff] %v942
    // Predicated region
    $region58: #{tpu_custom_call.1} parent=1 // pred_check
      _
    $region59: #{tpu_custom_call.1} parent=1 // pred_check_branch
      %946 = sbr.rel (0) target = $region61
    $region60: #{tpu_custom_call.1} parent=1 // pred_region
      %948 = vsyncadd [#allocation4], 0
      %s949 = sshll.u32 [#allocation13], 4
      %s950 = int_to_ptr.vmem [resolvable:$true] %s949
      %s951 = sshll.u32 %s8, 4
      %s952 = int_to_ptr.hbm [resolvable:$true] %s951
      %957 = dma.vmem_to_hbm [thread:$0]  %s950, 256, %s952, [#allocation4], 128, 128, 8
    $region61: #{tpu_custom_call.1} parent=1 // pred_fallthru
      _
    // Predicated region
    $region62: #{tpu_custom_call.1} parent=1 // pred_check
      _
    $region63: #{tpu_custom_call.1} parent=1 // pred_check_branch
      %959 = sbr.rel (0) target = $region65
    $region64: #{tpu_custom_call.1} parent=1 // pred_region
      %961 = dma.done [#allocation4], 256
    $region65: #{tpu_custom_call.1} parent=1 // pred_fallthru
      _
    %962 = vsyncpa [#allocation3], 1
    %963 = vsyncpa [#allocation6], 1
    %964 = vsyncpa [#allocation9], 1
    %965 = vsyncpa [#allocation12], 1
    %966 = vsyncpa [#allocation4], 1

</llo_original>
